<compile_context>
chip_gen: v7x
topology: tpu7x:2x2x1
jax: 0.10.0
libtpu: 0.0.40
codegen_flags: <defaults>
</compile_context>

<pallas_src>
import jax
import jax.numpy as jnp
from jax.experimental import pallas as pl
from jax.experimental.pallas import tpu as pltpu


_MAX_TILE_B = 1024  # cap on batch rows per grid step (multiple of 8)


def _choose_tile_b(batch):
    """Pick the batch tile.

    Big enough to amortize per-grid-step overhead, but >= 2 grid steps whenever the
    batch allows it so v7x's 2 TensorCores both get work under
    dimension_semantics=("parallel",). Tiles are a multiple of 8 (sublane) unless the
    whole batch fits in a single full-array block (exempt from the (8,128) rule).
    """
    half = (((batch + 1) // 2) + 7) // 8 * 8  # cdiv(batch, 2) rounded up to 8
    tile = min(_MAX_TILE_B, half)
    if tile >= batch:
        return batch
    return tile


def _fused_critic_kernel(obs_ref, act_ref, w0o_ref, w0a_ref, b0_ref,
                         w1_ref, b1_ref, w2_ref, b2_ref, out_ref):
    """Fused Q1/Q2 MLP: bf16 MXU matmuls, f32 accumulation/bias/ReLU, (TILE_B, 2) out."""
    bf16 = jnp.bfloat16
    obs = obs_ref[...].astype(bf16)
    act = act_ref[...].astype(bf16)
    h = (jnp.dot(obs, w0o_ref[...], preferred_element_type=jnp.float32)
         + jnp.dot(act, w0a_ref[...], preferred_element_type=jnp.float32)
         + b0_ref[...])
    h = jnp.maximum(h, 0.0)
    h = jnp.dot(h.astype(bf16), w1_ref[...],
                preferred_element_type=jnp.float32) + b1_ref[...]
    h = jnp.maximum(h, 0.0)
    out_ref[...] = (jnp.dot(h.astype(bf16), w2_ref[...],
                            preferred_element_type=jnp.float32)
                    + b2_ref[...])


def fuse_critic_params(q1_params, q2_params, ob_dim, ac_dim,
                       param_dtype=jnp.bfloat16):
    """Pack both Q networks into one weight set (done once, not per forward step).

    Eval path only: advice features are identically zero, so the advice rows of W0
    are dropped exactly (0 * w contributes 0 to the accumulation). Weights are stored
    in `param_dtype` (bf16 by default) for the single-pass MXU path; biases stay f32
    since they are added to the f32 accumulator.
    """
    w0_1, b0_1, w1_1, b1_1, w2_1, b2_1 = q1_params
    w0_2, b0_2, w1_2, b1_2, w2_2, b2_2 = q2_params
    size = w1_1.shape[0]
    oa = ob_dim + ac_dim

    w0_cat = jnp.concatenate([w0_1[:oa], w0_2[:oa]], axis=1)        # (oa, 2*size)
    w0_obs, w0_act = w0_cat[:ob_dim], w0_cat[ob_dim:]
    b0_cat = jnp.concatenate([b0_1, b0_2], axis=1)                  # (1, 2*size)

    z = jnp.zeros((size, size), jnp.float32)
    w1_blk = jnp.block([[w1_1, z], [z, w1_2]])                      # (2*size, 2*size)
    b1_cat = jnp.concatenate([b1_1, b1_2], axis=1)                  # (1, 2*size)

    w2_blk = jnp.concatenate(
        [jnp.concatenate([w2_1, jnp.zeros_like(w2_1)], axis=0),
         jnp.concatenate([jnp.zeros_like(w2_2), w2_2], axis=0)],
        axis=1)                                                     # (2*size, 2)
    b2_cat = jnp.concatenate([b2_1, b2_2], axis=1)                  # (1, 2)

    return (w0_obs.astype(param_dtype), w0_act.astype(param_dtype),
            b0_cat.astype(jnp.float32),
            w1_blk.astype(param_dtype), b1_cat.astype(jnp.float32),
            w2_blk.astype(param_dtype), b2_cat.astype(jnp.float32))


def fused_critic_forward(obs, action, fused_params):
    """Single pallas_call computing both critics -> (B, 2) float32 (q1, q2 packed)."""
    w0o, w0a, b0, w1, b1, w2, b2 = fused_params
    batch, ob_dim = obs.shape
    ac_dim = action.shape[1]

    tile_b = _choose_tile_b(batch)
    grid = (pl.cdiv(batch, tile_b),)

    def resident(arr):
        # Same block index every grid step -> weights/biases stay resident in VMEM.
        return pl.BlockSpec(arr.shape, lambda i: (0, 0))

    return pl.pallas_call(
        _fused_critic_kernel,
        out_shape=jax.ShapeDtypeStruct((batch, 2), jnp.float32),
        grid=grid,
        in_specs=[
            pl.BlockSpec((tile_b, ob_dim), lambda i: (i, 0)),
            pl.BlockSpec((tile_b, ac_dim), lambda i: (i, 0)),
            resident(w0o), resident(w0a), resident(b0),
            resident(w1), resident(b1), resident(w2), resident(b2),
        ],
        out_specs=pl.BlockSpec((tile_b, 2), lambda i: (i, 0)),
        compiler_params=pltpu.CompilerParams(
            dimension_semantics=("parallel",),
            # Explicit headroom so lane-padded (tile_b, 128)-equivalent double-buffered
            # tiles never trip v5e's 16 MiB scoped-VMEM default as tile_b scales.
            vmem_limit_bytes=32 * 1024 * 1024,
        ),
    )(obs, action, w0o, w0a, b0, w1, b1, w2, b2)


@jax.jit
def peer_sac_critic_forward(obs, action, fused_params):
    """Forward pass of PeerSACCritic (eval path: advice is zeros).

    Returns the packed (B, 2) float32 array: column 0 is q1, column 1 is q2.
    (Returning the packed result avoids two extra XLA slice kernels per call;
    use `split_q` if the original [q1, q2] list form is needed.)
    """
    return fused_critic_forward(obs, action, fused_params)


def split_q(packed):
    """Convenience: packed (B, 2) -> [q1 (B,1), q2 (B,1)] matching the torch module."""
    return [packed[:, 0:1], packed[:, 1:2]]


def init_q_params(key, in_dim, size, out_dim=1):
    """Deterministic init mimicking torch.nn.Linear default U(-1/sqrt(fan_in), 1/sqrt(fan_in))."""
    keys = jax.random.split(key, 6)

    def linear(kw, kb, fan_in, fan_out):
        bound = 1.0 / jnp.sqrt(jnp.float32(fan_in))
        w = jax.random.uniform(kw, (fan_in, fan_out), jnp.float32, -bound, bound)
        b = jax.random.uniform(kb, (1, fan_out), jnp.float32, -bound, bound)
        return w, b

    w0, b0 = linear(keys[0], keys[1], in_dim, size)
    w1, b1 = linear(keys[2], keys[3], size, size)
    w2, b2 = linear(keys[4], keys[5], size, out_dim)
    return (w0, b0, w1, b1, w2, b2)


def _reference_mlp_f32(x, params):
    """Original-module semantics: full f32 MLP."""
    w0, b0, w1, b1, w2, b2 = params
    h = jnp.maximum(x @ w0 + b0, 0.0)
    h = jnp.maximum(h @ w1 + b1, 0.0)
    return h @ w2 + b2


def _reference_mixed(obs, action, fused_params):
    """Plain-JAX replica of the kernel's mixed precision (bf16 operands, f32 acc)."""
    w0o, w0a, b0, w1, b1, w2, b2 = fused_params
    bf16 = jnp.bfloat16
    h = (jnp.dot(obs.astype(bf16), w0o, preferred_element_type=jnp.float32)
         + jnp.dot(action.astype(bf16), w0a, preferred_element_type=jnp.float32)
         + b0)
    h = jnp.maximum(h, 0.0)
    h = jnp.dot(h.astype(bf16), w1, preferred_element_type=jnp.float32) + b1
    h = jnp.maximum(h, 0.0)
    return jnp.dot(h.astype(bf16), w2, preferred_element_type=jnp.float32) + b2


if __name__ == "__main__":
    # hparams (small, consistent with the module's forward; n_layers=2 hidden ReLU layers)
    ob_dim = 8
    ac_dim = 4
    advice_dim = 4
    size = 32
    batch = 8
    in_dim = ob_dim + ac_dim + advice_dim

    key = jax.random.PRNGKey(0)
    k_obs, k_act, k_q1, k_q2, k_big = jax.random.split(key, 5)

    obs = jax.random.normal(k_obs, (batch, ob_dim), jnp.float32)
    action = jax.random.normal(k_act, (batch, ac_dim), jnp.float32)

    q1_params = init_q_params(k_q1, in_dim, size)
    q2_params = init_q_params(k_q2, in_dim, size)
    fused_params = fuse_critic_params(q1_params, q2_params, ob_dim, ac_dim)

    out = peer_sac_critic_forward(obs, action, fused_params)
    jax.block_until_ready(out)
    q1, q2 = split_q(out)
    assert out.shape == (batch, 2)
    assert q1.shape == (batch, 1) and q2.shape == (batch, 1)

    # Tight check: kernel vs plain-JAX replica of the same bf16/f32 mixed precision.
    ref_mixed = _reference_mixed(obs, action, fused_params)
    assert jnp.allclose(out, ref_mixed, atol=1e-4, rtol=1e-4)

    # Semantics check: against the original full-f32 module math (bf16-weight tolerance).
    x = jnp.concatenate(
        [obs, action, jnp.zeros((batch, advice_dim), jnp.float32)], axis=-1
    )
    ref_q1 = _reference_mlp_f32(x, q1_params)
    ref_q2 = _reference_mlp_f32(x, q2_params)
    assert jnp.allclose(q1, ref_q1, atol=5e-2, rtol=5e-2)
    assert jnp.allclose(q2, ref_q2, atol=5e-2, rtol=5e-2)

    # Exercise the multi-step batch grid (>=2 steps for v7x TC sharding; ragged last block).
    big_b = 1000
    kb1, kb2 = jax.random.split(k_big)
    obs_b = jax.random.normal(kb1, (big_b, ob_dim), jnp.float32)
    act_b = jax.random.normal(kb2, (big_b, ac_dim), jnp.float32)
    out_b = peer_sac_critic_forward(obs_b, act_b, fused_params)
    jax.block_until_ready(out_b)
    assert out_b.shape == (big_b, 2)
    ref_mixed_b = _reference_mixed(obs_b, act_b, fused_params)
    assert jnp.allclose(out_b, ref_mixed_b, atol=1e-4, rtol=1e-4)
    xb = jnp.concatenate(
        [obs_b, act_b, jnp.zeros((big_b, advice_dim), jnp.float32)], axis=-1
    )
    q1b, q2b = split_q(out_b)
    assert jnp.allclose(q1b, _reference_mlp_f32(xb, q1_params), atol=5e-2, rtol=5e-2)
    assert jnp.allclose(q2b, _reference_mlp_f32(xb, q2_params), atol=5e-2, rtol=5e-2)

    print("KERNEL_OK")
</pallas_src>

<mosaic_0001>
module attributes {stable_mosaic.version = 11 : i64} {
  func.func @_fused_critic_kernel(%arg0: i32, %arg1: memref<8x8xf32, #tpu.memory_space<vmem>>, %arg2: memref<8x4xf32, #tpu.memory_space<vmem>>, %arg3: memref<8x64xbf16, #tpu.memory_space<vmem>>, %arg4: memref<4x64xbf16, #tpu.memory_space<vmem>>, %arg5: memref<1x64xf32, #tpu.memory_space<vmem>>, %arg6: memref<64x64xbf16, #tpu.memory_space<vmem>>, %arg7: memref<1x64xf32, #tpu.memory_space<vmem>>, %arg8: memref<64x2xbf16, #tpu.memory_space<vmem>>, %arg9: memref<1x2xf32, #tpu.memory_space<vmem>>, %arg10: memref<8x2xf32, #tpu.memory_space<vmem>>) attributes {dimension_semantics = [#tpu.dimension_semantics<parallel>], iteration_bounds = array<i64: 1>, scalar_prefetch = 0 : i64, scratch_operands = 0 : i64, tpu.core_type = #tpu.core_type<tc>, window_params = [{transform_indices = @transform_0, window_bounds = array<i64: 8, 8>}, {transform_indices = @transform_1, window_bounds = array<i64: 8, 4>}, {pipeline_mode = #tpu.pipeline_mode<synchronous>, transform_indices = @transform_2, window_bounds = array<i64: 8, 64>}, {pipeline_mode = #tpu.pipeline_mode<synchronous>, transform_indices = @transform_3, window_bounds = array<i64: 4, 64>}, {pipeline_mode = #tpu.pipeline_mode<synchronous>, transform_indices = @transform_4, window_bounds = array<i64: 1, 64>}, {pipeline_mode = #tpu.pipeline_mode<synchronous>, transform_indices = @transform_5, window_bounds = array<i64: 64, 64>}, {pipeline_mode = #tpu.pipeline_mode<synchronous>, transform_indices = @transform_6, window_bounds = array<i64: 1, 64>}, {pipeline_mode = #tpu.pipeline_mode<synchronous>, transform_indices = @transform_7, window_bounds = array<i64: 64, 2>}, {pipeline_mode = #tpu.pipeline_mode<synchronous>, transform_indices = @transform_8, window_bounds = array<i64: 1, 2>}, {transform_indices = @transform_9, window_bounds = array<i64: 8, 2>}]} {
    %c0 = arith.constant 0 : index
    %c0_0 = arith.constant 0 : index
    %0 = vector.load %arg1[%c0, %c0_0] : memref<8x8xf32, #tpu.memory_space<vmem>>, vector<8x8xf32>
    %1 = arith.truncf %0 : vector<8x8xf32> to vector<8x8xbf16>
    %c0_1 = arith.constant 0 : index
    %c0_2 = arith.constant 0 : index
    %2 = vector.load %arg2[%c0_1, %c0_2] : memref<8x4xf32, #tpu.memory_space<vmem>>, vector<8x4xf32>
    %3 = arith.truncf %2 : vector<8x4xf32> to vector<8x4xbf16>
    %c0_3 = arith.constant 0 : index
    %c0_4 = arith.constant 0 : index
    %4 = vector.load %arg3[%c0_3, %c0_4] : memref<8x64xbf16, #tpu.memory_space<vmem>>, vector<8x64xbf16>
    %cst = arith.constant dense<0.000000e+00> : vector<8x64xf32>
    %5 = tpu.matmul %1, %4, %cst {dimension_numbers = #tpu.dot_dimension_numbers<[1], [0], [0], [1], [0, 0, 1, 1], [], []>} : vector<8x8xbf16>, vector<8x64xbf16>, vector<8x64xf32> -> vector<8x64xf32>
    %c0_5 = arith.constant 0 : index
    %c0_6 = arith.constant 0 : index
    %6 = vector.load %arg4[%c0_5, %c0_6] : memref<4x64xbf16, #tpu.memory_space<vmem>>, vector<4x64xbf16>
    %cst_7 = arith.constant dense<0.000000e+00> : vector<8x64xf32>
    %7 = tpu.matmul %3, %6, %cst_7 {dimension_numbers = #tpu.dot_dimension_numbers<[1], [0], [0], [1], [0, 0, 1, 1], [], []>} : vector<8x4xbf16>, vector<4x64xbf16>, vector<8x64xf32> -> vector<8x64xf32>
    %8 = arith.addf %5, %7 : vector<8x64xf32>
    %c0_8 = arith.constant 0 : index
    %c0_9 = arith.constant 0 : index
    %9 = vector.load %arg5[%c0_8, %c0_9] : memref<1x64xf32, #tpu.memory_space<vmem>>, vector<1x64xf32>
    %10 = vector.broadcast %9 : vector<1x64xf32> to vector<8x64xf32>
    %11 = arith.addf %8, %10 : vector<8x64xf32>
    %cst_10 = arith.constant 0.000000e+00 : f32
    %12 = vector.broadcast %cst_10 : f32 to vector<8x64xf32>
    %13 = arith.maximumf %11, %12 : vector<8x64xf32>
    %14 = arith.truncf %13 : vector<8x64xf32> to vector<8x64xbf16>
    %c0_11 = arith.constant 0 : index
    %c0_12 = arith.constant 0 : index
    %15 = vector.load %arg6[%c0_11, %c0_12] : memref<64x64xbf16, #tpu.memory_space<vmem>>, vector<64x64xbf16>
    %cst_13 = arith.constant dense<0.000000e+00> : vector<8x64xf32>
    %16 = tpu.matmul %14, %15, %cst_13 {dimension_numbers = #tpu.dot_dimension_numbers<[1], [0], [0], [1], [0, 0, 1, 1], [], []>} : vector<8x64xbf16>, vector<64x64xbf16>, vector<8x64xf32> -> vector<8x64xf32>
    %c0_14 = arith.constant 0 : index
    %c0_15 = arith.constant 0 : index
    %17 = vector.load %arg7[%c0_14, %c0_15] : memref<1x64xf32, #tpu.memory_space<vmem>>, vector<1x64xf32>
    %18 = vector.broadcast %17 : vector<1x64xf32> to vector<8x64xf32>
    %19 = arith.addf %16, %18 : vector<8x64xf32>
    %cst_16 = arith.constant 0.000000e+00 : f32
    %20 = vector.broadcast %cst_16 : f32 to vector<8x64xf32>
    %21 = arith.maximumf %19, %20 : vector<8x64xf32>
    %22 = arith.truncf %21 : vector<8x64xf32> to vector<8x64xbf16>
    %c0_17 = arith.constant 0 : index
    %c0_18 = arith.constant 0 : index
    %23 = vector.load %arg8[%c0_17, %c0_18] : memref<64x2xbf16, #tpu.memory_space<vmem>>, vector<64x2xbf16>
    %cst_19 = arith.constant dense<0.000000e+00> : vector<8x2xf32>
    %24 = tpu.matmul %22, %23, %cst_19 {dimension_numbers = #tpu.dot_dimension_numbers<[1], [0], [0], [1], [0, 0, 1, 1], [], []>} : vector<8x64xbf16>, vector<64x2xbf16>, vector<8x2xf32> -> vector<8x2xf32>
    %c0_20 = arith.constant 0 : index
    %c0_21 = arith.constant 0 : index
    %25 = vector.load %arg9[%c0_20, %c0_21] : memref<1x2xf32, #tpu.memory_space<vmem>>, vector<1x2xf32>
    %26 = vector.broadcast %25 : vector<1x2xf32> to vector<8x2xf32>
    %27 = arith.addf %24, %26 : vector<8x2xf32>
    %c0_22 = arith.constant 0 : index
    %c0_23 = arith.constant 0 : index
    %28 = vector.load %arg10[%c0_22, %c0_23] : memref<8x2xf32, #tpu.memory_space<vmem>>, vector<8x2xf32>
    tpu.vector_store %arg10[%c0_22, %c0_23], %27 {strides = array<i32>} : memref<8x2xf32, #tpu.memory_space<vmem>>, vector<8x2xf32>,
    return
  }
  func.func @transform_0(%arg0: i32) -> (i32, i32) {
    %c0_i32 = arith.constant 0 : i32
    %c0_i32_0 = arith.constant 0 : i32
    return %arg0, %c0_i32 : i32, i32
  }
  func.func @transform_1(%arg0: i32) -> (i32, i32) {
    %c0_i32 = arith.constant 0 : i32
    %c0_i32_0 = arith.constant 0 : i32
    return %arg0, %c0_i32 : i32, i32
  }
  func.func @transform_2(%arg0: i32) -> (i32, i32) {
    %c0_i32 = arith.constant 0 : i32
    %c0_i32_0 = arith.constant 0 : i32
    %c0_i32_1 = arith.constant 0 : i32
    return %c0_i32, %c0_i32_0 : i32, i32
  }
  func.func @transform_3(%arg0: i32) -> (i32, i32) {
    %c0_i32 = arith.constant 0 : i32
    %c0_i32_0 = arith.constant 0 : i32
    %c0_i32_1 = arith.constant 0 : i32
    return %c0_i32, %c0_i32_0 : i32, i32
  }
  func.func @transform_4(%arg0: i32) -> (i32, i32) {
    %c0_i32 = arith.constant 0 : i32
    %c0_i32_0 = arith.constant 0 : i32
    %c0_i32_1 = arith.constant 0 : i32
    return %c0_i32, %c0_i32_0 : i32, i32
  }
  func.func @transform_5(%arg0: i32) -> (i32, i32) {
    %c0_i32 = arith.constant 0 : i32
    %c0_i32_0 = arith.constant 0 : i32
    %c0_i32_1 = arith.constant 0 : i32
    return %c0_i32, %c0_i32_0 : i32, i32
  }
  func.func @transform_6(%arg0: i32) -> (i32, i32) {
    %c0_i32 = arith.constant 0 : i32
    %c0_i32_0 = arith.constant 0 : i32
    %c0_i32_1 = arith.constant 0 : i32
    return %c0_i32, %c0_i32_0 : i32, i32
  }
  func.func @transform_7(%arg0: i32) -> (i32, i32) {
    %c0_i32 = arith.constant 0 : i32
    %c0_i32_0 = arith.constant 0 : i32
    %c0_i32_1 = arith.constant 0 : i32
    return %c0_i32, %c0_i32_0 : i32, i32
  }
  func.func @transform_8(%arg0: i32) -> (i32, i32) {
    %c0_i32 = arith.constant 0 : i32
    %c0_i32_0 = arith.constant 0 : i32
    %c0_i32_1 = arith.constant 0 : i32
    return %c0_i32, %c0_i32_0 : i32, i32
  }
  func.func @transform_9(%arg0: i32) -> (i32, i32) {
    %c0_i32 = arith.constant 0 : i32
    %c0_i32_0 = arith.constant 0 : i32
    return %arg0, %c0_i32 : i32, i32
  }
}

</mosaic_0001>

<llo_original>
// kernel: peer_sac_critic_forward.1
$region0: #{peer_sac_critic_forward.1}
  #allocation0 [shape = 'u32[]', space=smem, size = 0x4, offset = 0x4, fixed_abs, tag = 'smem constant byte address 0x4 - core index']
  #allocation1 [shape = 'u32[144,128]{1,0:T(1,128)}', space=vmem, size = 0x12000, scoped, tag = 'internal scratch']
  %s0 = inlined_call_operand.vmem [shape: f32[8,8], index: 0, kind: input, shape index: {}]
  %s1 = inlined_call_operand.vmem [shape: f32[8,4], index: 1, kind: input, shape index: {}]
  %s2 = inlined_call_operand.vmem [shape: bf16[8,64], index: 2, kind: input, shape index: {}]
  %s3 = inlined_call_operand.vmem [shape: bf16[4,64], index: 3, kind: input, shape index: {}]
  %s4 = inlined_call_operand.vmem [shape: f32[1,64], index: 4, kind: input, shape index: {}]
  %s5 = inlined_call_operand.vmem [shape: bf16[64,64], index: 5, kind: input, shape index: {}]
  %s6 = inlined_call_operand.vmem [shape: f32[1,64], index: 6, kind: input, shape index: {}]
  %s7 = inlined_call_operand.vmem [shape: bf16[64,2], index: 7, kind: input, shape index: {}]
  %s8 = inlined_call_operand.vmem [shape: f32[1,2], index: 8, kind: input, shape index: {}]
  %s9 = inlined_call_operand.vmem [shape: f32[8,2], index: 9, kind: output, shape index: {}]
  %s10 = sld [smem:[#allocation0]]
  $region46: #{peer_sac_critic_forward.1} parent=0
    _
  %s12 = ssub.s32 1, %s10
  %s13 = scalar_select 0, %s12, %s10
  // Predicated region
  $region2: #{peer_sac_critic_forward.1} parent=0 // pred_check
    _
  $region3: #{peer_sac_critic_forward.1} parent=0 // pred_check_branch
    %15 = sbr.rel (0) target = $region5
  $region4: #{peer_sac_critic_forward.1} parent=0 // pred_region
    _
  $region5: #{peer_sac_critic_forward.1} parent=0 // pred_fallthru
    _
  // Predicated region
  $region6: #{peer_sac_critic_forward.1} parent=0 // pred_check
    _
  $region7: #{peer_sac_critic_forward.1} parent=0 // pred_check_branch
    %17 = sbr.rel (0) target = $region9
  $region8: #{peer_sac_critic_forward.1} parent=0 // pred_region
    _
  $region9: #{peer_sac_critic_forward.1} parent=0 // pred_fallthru
    _
  // Predicated region
  $region10: #{peer_sac_critic_forward.1} parent=0 // pred_check
    _
  $region11: #{peer_sac_critic_forward.1} parent=0 // pred_check_branch
    %19 = sbr.rel (0) target = $region13
  $region12: #{peer_sac_critic_forward.1} parent=0 // pred_region
    _
  $region13: #{peer_sac_critic_forward.1} parent=0 // pred_fallthru
    _
  // Predicated region
  $region14: #{peer_sac_critic_forward.1} parent=0 // pred_check
    _
  $region15: #{peer_sac_critic_forward.1} parent=0 // pred_check_branch
    %21 = sbr.rel (0) target = $region17
  $region16: #{peer_sac_critic_forward.1} parent=0 // pred_region
    _
  $region17: #{peer_sac_critic_forward.1} parent=0 // pred_fallthru
    _
  // Predicated region
  $region18: #{peer_sac_critic_forward.1} parent=0 // pred_check
    _
  $region19: #{peer_sac_critic_forward.1} parent=0 // pred_check_branch
    %23 = sbr.rel (0) target = $region21
  $region20: #{peer_sac_critic_forward.1} parent=0 // pred_region
    _
  $region21: #{peer_sac_critic_forward.1} parent=0 // pred_fallthru
    _
  // Predicated region
  $region22: #{peer_sac_critic_forward.1} parent=0 // pred_check
    _
  $region23: #{peer_sac_critic_forward.1} parent=0 // pred_check_branch
    %25 = sbr.rel (0) target = $region25
  $region24: #{peer_sac_critic_forward.1} parent=0 // pred_region
    _
  $region25: #{peer_sac_critic_forward.1} parent=0 // pred_fallthru
    _
  // Predicated region
  $region26: #{peer_sac_critic_forward.1} parent=0 // pred_check
    _
  $region27: #{peer_sac_critic_forward.1} parent=0 // pred_check_branch
    %27 = sbr.rel (0) target = $region29
  $region28: #{peer_sac_critic_forward.1} parent=0 // pred_region
    _
  $region29: #{peer_sac_critic_forward.1} parent=0 // pred_fallthru
    _
  // Predicated region
  $region30: #{peer_sac_critic_forward.1} parent=0 // pred_check
    _
  $region31: #{peer_sac_critic_forward.1} parent=0 // pred_check_branch
    %29 = sbr.rel (0) target = $region33
  $region32: #{peer_sac_critic_forward.1} parent=0 // pred_region
    _
  $region33: #{peer_sac_critic_forward.1} parent=0 // pred_fallthru
    _
  // Predicated region
  $region34: #{peer_sac_critic_forward.1} parent=0 // pred_check
    _
  $region35: #{peer_sac_critic_forward.1} parent=0 // pred_check_branch
    %31 = sbr.rel (0) target = $region37
  $region36: #{peer_sac_critic_forward.1} parent=0 // pred_region
    _
  $region37: #{peer_sac_critic_forward.1} parent=0 // pred_fallthru
    _
  %v33 = vld [vmem:[%s0] sm:$0xff]
  %v34 = vpack.c.bf16 %v33, %v33
  %v35 = vld [vmem:[%s1] sm:$0xff]
  %v36 = vpack.c.bf16 %v35, %v35
  %v37 = vld [vmem:[%s2] sm:$0xf]
  %v38 = vld [vmem:[%s3] sm:$0x3]
  %vm39 = vcmask 31744
  %v41 = vsel %vm39, %v36, 0
  %vm43 = vcmask 1041408
  %v45 = vsel %vm43, %v38, 0
  %47 = vmatprep.subr.bf16.mxu0 0
  %48 = vmatpush1.bf16.msra.mxu0 %v45
  %49 = vmatprep.subr.bf16.mxu0 0
  %50 = vmatpush1.bf16.msra.mxu0 0
  %51 = vmatprep.subr.bf16.mxu0 0
  %52 = vmatpush1.bf16.msra.mxu0 0
  %53 = vmatprep.subr.bf16.mxu0 0
  %54 = vmatpush1.bf16.msra.mxu0 0
  %55 = vmatprep.subr.bf16.mxu0 0
  %56 = vmatpush1.bf16.msra.mxu0 0
  %57 = vmatprep.subr.bf16.mxu0 0
  %58 = vmatpush1.bf16.msra.mxu0 0
  %59 = vmatprep.subr.bf16.mxu0 0
  %60 = vmatpush1.bf16.msra.mxu0 0
  %61 = vmatprep.subr.bf16.mxu0 0
  %62 = vmatpush1.bf16.msra.mxu0 0
  %63 = vmatprep.subr.bf16.mxu0 0
  %64 = vmatpush1.bf16.msra.mxu0 0
  %65 = vmatprep.subr.bf16.mxu0 0
  %66 = vmatpush1.bf16.msra.mxu0 0
  %67 = vmatprep.subr.bf16.mxu0 0
  %68 = vmatpush1.bf16.msra.mxu0 0
  %69 = vmatprep.subr.bf16.mxu0 0
  %70 = vmatpush1.bf16.msra.mxu0 0
  %71 = vmatprep.subr.bf16.mxu0 0
  %72 = vmatpush1.bf16.msra.mxu0 0
  %73 = vmatprep.subr.bf16.mxu0 0
  %74 = vmatpush1.bf16.msra.mxu0 0
  %75 = vmatprep.subr.bf16.mxu0 0
  %76 = vmatpush1.bf16.msra.mxu0 0
  %77 = vmatprep.subr.bf16.mxu0 0
  %78 = vmatpush1.bf16.msra.mxu0 0
  %79 = vmatprep.mubr.bf16.mxu0 0
  %80 = vmatmul.mubr.bf16.gmra.mrb[0].mxu0 %v41
  %v81 = vpop.f32.mrb[0].mxu0
  %v82 = vadd.f32 0.0, %v81
  %v83 = vpop.f32.mrb[0].mxu0
  %v84 = vpop.f32.mrb[0].mxu0
  %v85 = vpop.f32.mrb[0].mxu0
  %86 = vdwg.mxu0
  %vm87 = vcmask 64512
  %v89 = vsel %vm87, %v34, 0
  %vm91 = vcmask 1043456
  %v93 = vsel %vm91, %v37, 0
  %95 = vmatprep.subr.bf16.mxu0 0
  %96 = vmatpush1.bf16.msra.mxu0 %v93
  %97 = vmatprep.subr.bf16.mxu0 0
  %98 = vmatpush1.bf16.msra.mxu0 0
  %99 = vmatprep.subr.bf16.mxu0 0
  %100 = vmatpush1.bf16.msra.mxu0 0
  %101 = vmatprep.subr.bf16.mxu0 0
  %102 = vmatpush1.bf16.msra.mxu0 0
  %103 = vmatprep.subr.bf16.mxu0 0
  %104 = vmatpush1.bf16.msra.mxu0 0
  %105 = vmatprep.subr.bf16.mxu0 0
  %106 = vmatpush1.bf16.msra.mxu0 0
  %107 = vmatprep.subr.bf16.mxu0 0
  %108 = vmatpush1.bf16.msra.mxu0 0
  %109 = vmatprep.subr.bf16.mxu0 0
  %110 = vmatpush1.bf16.msra.mxu0 0
  %111 = vmatprep.subr.bf16.mxu0 0
  %112 = vmatpush1.bf16.msra.mxu0 0
  %113 = vmatprep.subr.bf16.mxu0 0
  %114 = vmatpush1.bf16.msra.mxu0 0
  %115 = vmatprep.subr.bf16.mxu0 0
  %116 = vmatpush1.bf16.msra.mxu0 0
  %117 = vmatprep.subr.bf16.mxu0 0
  %118 = vmatpush1.bf16.msra.mxu0 0
  %119 = vmatprep.subr.bf16.mxu0 0
  %120 = vmatpush1.bf16.msra.mxu0 0
  %121 = vmatprep.subr.bf16.mxu0 0
  %122 = vmatpush1.bf16.msra.mxu0 0
  %123 = vmatprep.subr.bf16.mxu0 0
  %124 = vmatpush1.bf16.msra.mxu0 0
  %125 = vmatprep.subr.bf16.mxu0 0
  %126 = vmatpush1.bf16.msra.mxu0 0
  %127 = vmatprep.mubr.bf16.mxu0 0
  %128 = vmatmul.mubr.bf16.gmra.mrb[0].mxu0 %v89
  %v129 = vpop.f32.mrb[0].mxu0
  %v130 = vadd.f32 %v82, %v129
  %v131 = vpop.f32.mrb[0].mxu0
  %v132 = vpop.f32.mrb[0].mxu0
  %v133 = vpop.f32.mrb[0].mxu0
  %134 = vdwg.mxu0
  %v135 = vld [vmem:[%s4] sm:$0x1]
  %v137 = vlaneseq
  %v138 = vshrl.u32 %v137, 7
  %v139 = vsub.s32 0, %v138
  %v140 = vrot.slane %v135, %v139
  %v142 = vadd.f32 %v130, %v140
  %v143 = vmax.f32 %v142, 0.0
  %v144 = vpack.c.bf16 %v143, %v143
  %v145 = vld [vmem:[%s5] sm:$0xf]
  %v146 = vld [vmem:[%s5 + $0x4] sm:$0xf]
  %v147 = vld [vmem:[%s5 + $0x8] sm:$0xf]
  %v148 = vld [vmem:[%s5 + $0xc] sm:$0xf]
  %v149 = vld [vmem:[%s5 + $0x10] sm:$0xf]
  %v150 = vld [vmem:[%s5 + $0x14] sm:$0xf]
  %v151 = vld [vmem:[%s5 + $0x18] sm:$0xf]
  %v152 = vld [vmem:[%s5 + $0x1c] sm:$0xf]
  %v153 = vld [vmem:[%s6] sm:$0x1]
  %v155 = vlaneseq
  %v156 = vshrl.u32 %v155, 7
  %v157 = vsub.s32 0, %v156
  %v158 = vrot.slane %v153, %v157
  %v168 = vunpack.c.l.b16 %v145
  %v169 = vunpack.c.l.b16 %v146
  %v170 = vunpack.c.l.b16 %v147
  %v171 = vunpack.c.l.b16 %v148
  %v172 = vunpack.c.l.b16 %v149
  %v173 = vunpack.c.l.b16 %v150
  %v174 = vunpack.c.l.b16 %v151
  %v175 = vunpack.c.l.b16 %v152
  %v176 = vpack.c.b16 %v169, %v168
  %v177 = vpack.c.b16 %v171, %v170
  %v178 = vpack.c.b16 %v173, %v172
  %v179 = vpack.c.b16 %v175, %v174
  %vm184 = vcmask 523264
  %v186 = vsel %vm184, %v144, 0
  %188 = vmatprep.subr.bf16.mxu0 0
  %189 = vmatpush1.bf16.msra.mxu0 %v176
  %190 = vmatprep.subr.bf16.mxu0 0
  %191 = vmatpush1.bf16.msra.mxu0 %v177
  %192 = vmatprep.subr.bf16.mxu0 0
  %193 = vmatpush1.bf16.msra.mxu0 %v178
  %194 = vmatprep.subr.bf16.mxu0 0
  %195 = vmatpush1.bf16.msra.mxu0 %v179
  %196 = vmatprep.subr.bf16.mxu0 0
  %197 = vmatpush1.bf16.msra.mxu0 0
  %198 = vmatprep.subr.bf16.mxu0 0
  %199 = vmatpush1.bf16.msra.mxu0 0
  %200 = vmatprep.subr.bf16.mxu0 0
  %201 = vmatpush1.bf16.msra.mxu0 0
  %202 = vmatprep.subr.bf16.mxu0 0
  %203 = vmatpush1.bf16.msra.mxu0 0
  %204 = vmatprep.subr.bf16.mxu0 0
  %205 = vmatpush1.bf16.msra.mxu0 0
  %206 = vmatprep.subr.bf16.mxu0 0
  %207 = vmatpush1.bf16.msra.mxu0 0
  %208 = vmatprep.subr.bf16.mxu0 0
  %209 = vmatpush1.bf16.msra.mxu0 0
  %210 = vmatprep.subr.bf16.mxu0 0
  %211 = vmatpush1.bf16.msra.mxu0 0
  %212 = vmatprep.subr.bf16.mxu0 0
  %213 = vmatpush1.bf16.msra.mxu0 0
  %214 = vmatprep.subr.bf16.mxu0 0
  %215 = vmatpush1.bf16.msra.mxu0 0
  %216 = vmatprep.subr.bf16.mxu0 0
  %217 = vmatpush1.bf16.msra.mxu0 0
  %218 = vmatprep.subr.bf16.mxu0 0
  %219 = vmatpush1.bf16.msra.mxu0 0
  %220 = vmatprep.mubr.bf16.mxu0 0
  %221 = vmatmul.mubr.bf16.gmra.mrb[0].mxu0 %v186
  %v222 = vpop.f32.mrb[0].mxu0
  %v223 = vadd.f32 %v158, %v222
  %v224 = vpop.f32.mrb[0].mxu0
  %v225 = vpop.f32.mrb[0].mxu0
  %v226 = vpop.f32.mrb[0].mxu0
  %227 = vdwg.mxu0
  %v228 = vmax.f32 %v223, 0.0
  %v229 = vpack.c.bf16 %v228, %v228
  %v230 = vld [vmem:[%s7] sm:$0xf]
  %v231 = vld [vmem:[%s7 + $0x4] sm:$0xf]
  %v232 = vld [vmem:[%s7 + $0x8] sm:$0xf]
  %v233 = vld [vmem:[%s7 + $0xc] sm:$0xf]
  %v234 = vld [vmem:[%s7 + $0x10] sm:$0xf]
  %v235 = vld [vmem:[%s7 + $0x14] sm:$0xf]
  %v236 = vld [vmem:[%s7 + $0x18] sm:$0xf]
  %v237 = vld [vmem:[%s7 + $0x1c] sm:$0xf]
  %v238 = vld [vmem:[%s8] sm:$0x1]
  %v240 = vlaneseq
  %v241 = vshrl.u32 %v240, 7
  %v242 = vsub.s32 0, %v241
  %v243 = vrot.slane %v238, %v242
  %v253 = vunpack.c.l.b16 %v230
  %v254 = vunpack.c.l.b16 %v231
  %v255 = vunpack.c.l.b16 %v232
  %v256 = vunpack.c.l.b16 %v233
  %v257 = vunpack.c.l.b16 %v234
  %v258 = vunpack.c.l.b16 %v235
  %v259 = vunpack.c.l.b16 %v236
  %v260 = vunpack.c.l.b16 %v237
  %v261 = vpack.c.b16 %v254, %v253
  %v262 = vpack.c.b16 %v256, %v255
  %v263 = vpack.c.b16 %v258, %v257
  %v264 = vpack.c.b16 %v260, %v259
  %v270 = vsel %vm184, %v229, 0
  %272 = vmatprep.subr.bf16.mxu0 0
  %273 = vmatpush1.bf16.msra.mxu0 %v261
  %274 = vmatprep.subr.bf16.mxu0 0
  %275 = vmatpush1.bf16.msra.mxu0 %v262
  %276 = vmatprep.subr.bf16.mxu0 0
  %277 = vmatpush1.bf16.msra.mxu0 %v263
  %278 = vmatprep.subr.bf16.mxu0 0
  %279 = vmatpush1.bf16.msra.mxu0 %v264
  %280 = vmatprep.subr.bf16.mxu0 0
  %281 = vmatpush1.bf16.msra.mxu0 0
  %282 = vmatprep.subr.bf16.mxu0 0
  %283 = vmatpush1.bf16.msra.mxu0 0
  %284 = vmatprep.subr.bf16.mxu0 0
  %285 = vmatpush1.bf16.msra.mxu0 0
  %286 = vmatprep.subr.bf16.mxu0 0
  %287 = vmatpush1.bf16.msra.mxu0 0
  %288 = vmatprep.subr.bf16.mxu0 0
  %289 = vmatpush1.bf16.msra.mxu0 0
  %290 = vmatprep.subr.bf16.mxu0 0
  %291 = vmatpush1.bf16.msra.mxu0 0
  %292 = vmatprep.subr.bf16.mxu0 0
  %293 = vmatpush1.bf16.msra.mxu0 0
  %294 = vmatprep.subr.bf16.mxu0 0
  %295 = vmatpush1.bf16.msra.mxu0 0
  %296 = vmatprep.subr.bf16.mxu0 0
  %297 = vmatpush1.bf16.msra.mxu0 0
  %298 = vmatprep.subr.bf16.mxu0 0
  %299 = vmatpush1.bf16.msra.mxu0 0
  %300 = vmatprep.subr.bf16.mxu0 0
  %301 = vmatpush1.bf16.msra.mxu0 0
  %302 = vmatprep.subr.bf16.mxu0 0
  %303 = vmatpush1.bf16.msra.mxu0 0
  %304 = vmatprep.mubr.bf16.mxu0 0
  %305 = vmatmul.mubr.bf16.gmra.mrb[0].mxu0 %v270
  %v306 = vpop.f32.mrb[0].mxu0
  %v307 = vadd.f32 %v243, %v306
  %v308 = vpop.f32.mrb[0].mxu0
  %v309 = vpop.f32.mrb[0].mxu0
  %v310 = vpop.f32.mrb[0].mxu0
  %311 = vdwg.mxu0
  %vm312 = vcmask 15360
  %313 = vst.msk [vmem:[%s9] sm:$0xff] %vm312, %v307
  // Predicated region
  $region38: #{peer_sac_critic_forward.1} parent=0 // pred_check
    _
  $region39: #{peer_sac_critic_forward.1} parent=0 // pred_check_branch
    %315 = sbr.rel (0) target = $region41
  $region40: #{peer_sac_critic_forward.1} parent=0 // pred_region
    _
  $region41: #{peer_sac_critic_forward.1} parent=0 // pred_fallthru
    _
  // Predicated region
  $region42: #{peer_sac_critic_forward.1} parent=0 // pred_check
    _
  $region43: #{peer_sac_critic_forward.1} parent=0 // pred_check_branch
    %317 = sbr.rel (0) target = $region45
  $region44: #{peer_sac_critic_forward.1} parent=0 // pred_region
    _
  $region45: #{peer_sac_critic_forward.1} parent=0 // pred_fallthru
    _

</llo_original>
